<compile_context>
chip_gen: v7x
topology: tpu7x:2x2x1
jax: 0.10.0
libtpu: 0.0.40
codegen_flags: <defaults>
</compile_context>

<pallas_src>
import functools

import jax
import jax.numpy as jnp
from jax import lax
from jax.experimental import pallas as pl
from jax.experimental.pallas import tpu as pltpu


# ---- module hyper-parameters (from __init__), deterministic, in-script ----
MIN_ = 10                  # number of background seeds to sample
MAX_ = 10                  # number of foreground seeds to sample
MIN_P = 0.1                # fraction of lowest-CAM pixels forming BG candidates
FG_ERODE_K = 11            # unused when FG_ERODE_ITER == 0
FG_ERODE_ITER = 0          # 0 -> erode() is identity in forward
KSZ = 3                    # dilation kernel size (ksz x ksz ones)
SEG_IGNORE_IDX = -255
SUPPORT_BACKGROUND = True  # unused in forward (kept for parity)
MULTI_LABEL_FLAG = False

_VMEM_LIMIT_BYTES = 32 * 1024 * 1024       # explicit scoped-VMEM cap (v5e/v6e/v7x safe)
_VMEM_BLOCK_BUDGET = 10 * 1024 * 1024      # target per-step footprint for block picker
_EXACT_TOPK_MAX_N = 1 << 15                # below this, exact k-th order statistic


def _round_up(v, m):
    return ((v + m - 1) // m) * m


# ----------------------------- Pallas kernel -------------------------------
def _seed_kernel(m_ref, o_ref, *, ksz, ignore_idx, h, w, hp):
    # m_ref: (Bt*hp, wp) int8, zero-padded packed seed candidates
    #        (bit0 = sampled FG seed, bit1 = sampled BG seed); each image's
    #        real data sits at rows [j*hp, j*hp+h), cols [0, w), everything
    #        else is zero with >= ksz-1 zero rows/cols of high-side halo.
    # o_ref: (Bt, h, w) int32 -- the unpadded seed maps, written directly.
    wp = m_ref.shape[1]
    bt = m_ref.shape[0] // hp

    # TODO(synk): review asks for int8 rolls; packed-int8 sublane rotate
    # support is uncertain across TPU generations, so widen once to int32.
    m = m_ref[...].astype(jnp.int32)                  # (Bt*hp, wp)
    d = m
    if ksz > 1:
        pad_lo = ksz // 2
        pad_hi = ksz - 1 - pad_lo

        def dil_axis(v, axis):
            # out[i] = OR_{s in [-pad_lo, pad_hi]} v[i + s]
            # roll(v, (-s) % n)[i] == v[(i + s) % n]; because every image has
            # >= ksz-1 zero padding rows/cols on its high side (and the block
            # ends in such padding), every wrapped read lands on zeros, so the
            # circular roll behaves like a zero-filled shift -- for any ksz.
            n = v.shape[axis]
            out = v
            for s in range(-pad_lo, pad_hi + 1):
                if s == 0:
                    continue
                out = out | pltpu.roll(v, (-s) % n, axis)
            return out

        d = dil_axis(d, 1)    # along W (lanes)
        d = dil_axis(d, 0)    # along H (sublanes; inter-image halo keeps
                              # neighbouring images from bleeding into each other)

    # un-flatten (free: hp % 8 == 0) and keep only the unpadded interior.
    d = d.reshape(bt, hp, wp)[:, :h, :w]

    fg = (d & 1) > 0
    bg = (d & 2) > 0
    fg_only = jnp.logical_and(fg, jnp.logical_not(bg))   # "outer == 2" removed
    bg_only = jnp.logical_and(bg, jnp.logical_not(fg))

    seeds = jnp.where(fg_only, 1, jnp.where(bg_only, 0, ignore_idx))
    o_ref[...] = seeds.astype(o_ref.dtype)


# ------------------------- scalar threshold glue ----------------------------
def _otsu_from_hist(hist):
    """skimage.filters.threshold_otsu on a dense 0..255 histogram (counts).

    skimage bins integer images one-bin-per-value over [min, max]; padding the
    histogram with empty 0..255 bins only adds zero-variance splits, so the
    argmax (first maximum) lands on the same integer threshold value.
    """
    vals = jnp.arange(256, dtype=jnp.float32)
    w1 = jnp.cumsum(hist)
    w2 = jnp.cumsum(hist[::-1])[::-1]
    c1 = jnp.cumsum(hist * vals)
    c2 = jnp.cumsum((hist * vals)[::-1])[::-1]
    m1 = jnp.where(w1 > 0, c1 / jnp.maximum(w1, 1e-12), 0.0)
    m2 = jnp.where(w2 > 0, c2 / jnp.maximum(w2, 1e-12), 0.0)
    var12 = w1[:-1] * w2[1:] * (m1[:-1] - m2[1:]) ** 2
    return jnp.argmax(var12).astype(jnp.int32)       # threshold == bin index


def _pick_block_batch(b, h, w, hp, wp):
    """How many images per grid step (static heuristic).

    Budget counts the double-buffered int8 in / int32 out blocks plus the
    int32 in-kernel temporaries; keeps >= 2 grid steps when b >= 2 so both
    v7x TensorCores stay busy; picks a divisor of b to avoid batch padding.
    """
    bytes_per_img = hp * wp * 18 + h * w * 32
    cap = max(1, _VMEM_BLOCK_BUDGET // bytes_per_img)
    if b >= 2:
        cap = min(cap, (b + 1) // 2)
    cap = max(1, min(cap, b))
    bt = 1
    for d in range(1, cap + 1):
        if b % d == 0:
            bt = d
    return bt


# --------------------------------- wrapper ----------------------------------
def get_fast_seeder(x, key, *, min_=MIN_, max_=MAX_, min_p=MIN_P, ksz=KSZ,
                    seg_ignore_idx=SEG_IGNORE_IDX):
    assert x.ndim == 4 and x.shape[1] == 1
    b, _, h, w = x.shape
    n = h * w
    cam = jnp.clip(x[:, 0, :, :].astype(jnp.float32), 0.0, 1.0)     # (B, H, W)
    cam_u8 = jnp.floor(cam * 255.0).astype(jnp.int32)               # 0..255

    # ---- Otsu threshold: dense 256-bin histogram from a fused compare+reduce
    # (no per-image sort, no HBM-materialized one-hot).
    u8_flat = cam_u8.reshape(b, n)
    bins = jnp.arange(256, dtype=jnp.int32)
    hist = jnp.sum(u8_flat[:, :, None] == bins[None, None, :],
                   axis=1, dtype=jnp.float32)                       # (B, 256)
    bad_egg = jnp.max(u8_flat, axis=1) == jnp.min(u8_flat, axis=1)  # flat image

    otsu = jnp.clip(jax.vmap(_otsu_from_hist)(hist), 1, 254)        # (B,) i32
    roi = cam_u8 > otsu[:, None, None]
    # TODO(synk): fg_erode_iter == 0 in this config, so erosion_n() is the
    # identity in forward and is not ported.

    # ---- BG candidates: nbr_bg lowest-CAM pixels (order statistic cutoff,
    # no full sort; exact top_k for small images, approx_min_k for large).
    nbr_bg = int(min_p * h * w)                                     # static
    cam_flat = cam.reshape(b, n)
    if nbr_bg > 0:
        if n <= _EXACT_TOPK_MAX_N:
            t_bg = -lax.top_k(-cam_flat, nbr_bg)[0][:, nbr_bg - 1]  # exact k-th
        else:
            # approximate order statistic (review suggestion); may perturb the
            # candidate set by a handful of pixels near the cutoff.
            vals, _ = lax.approx_min_k(cam_flat, nbr_bg, recall_target=0.95)
            t_bg = jnp.max(vals, axis=-1)
        bg_cand = cam <= t_bg[:, None, None]
    else:
        bg_cand = jnp.zeros_like(roi)

    # ---- uniform-without-replacement sampling == keep the k smallest iid
    # noises among candidates; the k-th smallest comes from lax.top_k (k<=10).
    # One shared noise plane drives both samplings (FG/BG candidate sets are
    # essentially disjoint; per-set marginals stay uniform) -- halves the
    # noise-plane HBM traffic vs. two planes.
    # Exact float ties can select >k seeds (probability ~0 with f32 noise);
    # if a candidate set has < k members, all of them are taken (sentinel 2.0)
    # which matches torch.multinomial(num_samples=min(k, n_cand)).
    # TODO(synk): torch.multinomial's RNG stream cannot be reproduced; the
    # sampling distribution (uniform without replacement) is identical.
    # TODO(synk): next lever per review -- fuse quantization, candidate masks,
    # pltpu.prng_random_bits noise and the k-smallest selection into the
    # Pallas kernel to drop the noise/packed-plane HBM round-trips.
    noise = jax.random.uniform(key, (b, h, w), dtype=jnp.float32)
    noise_flat = noise.reshape(b, n)

    def sample(cand, k_budget):
        if k_budget <= 0:
            return jnp.zeros_like(cand)
        k = min(k_budget, n)
        scores = jnp.where(cand.reshape(b, n), noise_flat, 2.0)
        kth = -lax.top_k(-scores, k)[0][:, k - 1]                   # (B,)
        return jnp.logical_and(cand, noise <= kth[:, None, None])

    fg_sel = sample(roi, max_)
    bg_sel = sample(bg_cand, min_)

    keep = jnp.logical_not(bad_egg)[:, None, None]
    fg_sel = jnp.logical_and(fg_sel, keep)
    bg_sel = jnp.logical_and(bg_sel, keep)

    # pack both planes into one int8 plane: bit0 = fg seed, bit1 = bg seed.
    packed = fg_sel.astype(jnp.int8) + 2 * bg_sel.astype(jnp.int8)

    # zero-pad on the HIGH side only (data stays at the origin) so that
    # (a) every circular roll wraps into zeros, (b) tiles are lane-dense,
    # (c) the kernel can write the unpadded interior straight to the output.
    hp = _round_up(h + (ksz - 1), 8)
    wp = _round_up(w + (ksz - 1), 128)
    packed = jnp.pad(packed, ((0, 0), (0, hp - h), (0, wp - w)))
    packed = packed.reshape(b * hp, wp)          # flatten batch into sublanes

    bt = _pick_block_batch(b, h, w, hp, wp)      # images per grid step
    grid = (b // bt,)

    kern = functools.partial(_seed_kernel, ksz=ksz, ignore_idx=seg_ignore_idx,
                             h=h, w=w, hp=hp)
    out = pl.pallas_call(
        kern,
        out_shape=jax.ShapeDtypeStruct((b, h, w), jnp.int32),
        grid=grid,
        in_specs=[pl.BlockSpec((bt * hp, wp), lambda g: (g, 0))],
        out_specs=pl.BlockSpec((bt, h, w), lambda g: (g, 0, 0)),
        compiler_params=pltpu.CompilerParams(
            dimension_semantics=("parallel",),
            vmem_limit_bytes=_VMEM_LIMIT_BYTES),
    )(packed)
    # TODO(synk): for very large CAMs (>= ~1k per side) the whole-image block
    # should be split into H bands with a (ksz-1)-row halo; not needed here.

    return out   # (B, H, W) int32; PyTorch reference returns int64 (torch.long)


if __name__ == "__main__":
    key = jax.random.PRNGKey(0)
    kx, kn = jax.random.split(key)
    B, C, H, W = 2, 1, 16, 16
    x = jax.random.uniform(kx, (B, C, H, W), dtype=jnp.float32)   # CAMs in [0, 1)

    out = jax.block_until_ready(jax.jit(get_fast_seeder)(x, kn))

    assert out.shape == (B, H, W)
    assert out.dtype == jnp.int32
    vals = set(int(v) for v in jnp.unique(out).tolist())
    assert vals.issubset({0, 1, SEG_IGNORE_IDX}), vals
    print("KERNEL_OK")
</pallas_src>

<mosaic_0001>
module attributes {stable_mosaic.version = 11 : i64} {
  func.func @_seed_kernel(%arg0: i32, %arg1: memref<24x128xi8, #tpu.memory_space<vmem>>, %arg2: memref<1x16x16xi32, #tpu.memory_space<vmem>>) attributes {dimension_semantics = [#tpu.dimension_semantics<parallel>], iteration_bounds = array<i64: 2>, scalar_prefetch = 0 : i64, scratch_operands = 0 : i64, tpu.core_type = #tpu.core_type<tc>, window_params = [{transform_indices = @transform_0, window_bounds = array<i64: 24, 128>}, {transform_indices = @transform_1, window_bounds = array<i64: 1, 16, 16>}]} {
    %c0 = arith.constant 0 : index
    %c0_0 = arith.constant 0 : index
    %0 = vector.load %arg1[%c0, %c0_0] : memref<24x128xi8, #tpu.memory_space<vmem>>, vector<24x128xi8>
    %1 = arith.extsi %0 : vector<24x128xi8> to vector<24x128xi32>
    %c1_i32 = arith.constant 1 : i32
    %2 = tpu.dynamic_rotate %1 by %c1_i32 dim 1 : vector<24x128xi32>, i32 -> vector<24x128xi32>
    %3 = arith.ori %1, %2 : vector<24x128xi32>
    %c127_i32 = arith.constant 127 : i32
    %4 = tpu.dynamic_rotate %1 by %c127_i32 dim 1 : vector<24x128xi32>, i32 -> vector<24x128xi32>
    %5 = arith.ori %3, %4 : vector<24x128xi32>
    %c1_i32_1 = arith.constant 1 : i32
    %6 = tpu.dynamic_rotate %5 by %c1_i32_1 dim 0 : vector<24x128xi32>, i32 -> vector<24x128xi32>
    %7 = arith.ori %5, %6 : vector<24x128xi32>
    %c23_i32 = arith.constant 23 : i32
    %8 = tpu.dynamic_rotate %5 by %c23_i32 dim 0 : vector<24x128xi32>, i32 -> vector<24x128xi32>
    %9 = arith.ori %7, %8 : vector<24x128xi32>
    %10 = vector.shape_cast %9 : vector<24x128xi32> to vector<1x24x128xi32>
    %11 = vector.extract_strided_slice %10 {offsets = [0, 0, 0], sizes = [1, 16, 16], strides = [1, 1, 1]} : vector<1x24x128xi32> to vector<1x16x16xi32>
    %c1_i32_2 = arith.constant 1 : i32
    %12 = vector.broadcast %c1_i32_2 : i32 to vector<1x16x16xi32>
    %13 = arith.andi %11, %12 : vector<1x16x16xi32>
    %c0_i32 = arith.constant 0 : i32
    %14 = vector.broadcast %c0_i32 : i32 to vector<1x16x16xi32>
    %15 = arith.cmpi sgt, %13, %14 : vector<1x16x16xi32>
    %c2_i32 = arith.constant 2 : i32
    %16 = vector.broadcast %c2_i32 : i32 to vector<1x16x16xi32>
    %17 = arith.andi %11, %16 : vector<1x16x16xi32>
    %c0_i32_3 = arith.constant 0 : i32
    %18 = vector.broadcast %c0_i32_3 : i32 to vector<1x16x16xi32>
    %19 = arith.cmpi sgt, %17, %18 : vector<1x16x16xi32>
    %cst = arith.constant dense<true> : vector<1x16x16xi1>
    %20 = arith.xori %19, %cst : vector<1x16x16xi1>
    %21 = arith.andi %15, %20 : vector<1x16x16xi1>
    %cst_4 = arith.constant dense<true> : vector<1x16x16xi1>
    %22 = arith.xori %15, %cst_4 : vector<1x16x16xi1>
    %23 = arith.andi %19, %22 : vector<1x16x16xi1>
    %c0_i32_5 = arith.constant 0 : i32
    %c-255_i32 = arith.constant -255 : i32
    %24 = vector.broadcast %c0_i32_5 : i32 to vector<1x16x16xi32>
    %25 = vector.broadcast %c-255_i32 : i32 to vector<1x16x16xi32>
    %26 = arith.select %23, %24, %25 : vector<1x16x16xi1>, vector<1x16x16xi32>
    %c1_i32_6 = arith.constant 1 : i32
    %27 = vector.broadcast %c1_i32_6 : i32 to vector<1x16x16xi32>
    %28 = arith.select %21, %27, %26 : vector<1x16x16xi1>, vector<1x16x16xi32>
    %c0_7 = arith.constant 0 : index
    %c0_8 = arith.constant 0 : index
    %c0_9 = arith.constant 0 : index
    %29 = vector.load %arg2[%c0_7, %c0_8, %c0_9] : memref<1x16x16xi32, #tpu.memory_space<vmem>>, vector<1x16x16xi32>
    tpu.vector_store %arg2[%c0_7, %c0_8, %c0_9], %28 {strides = array<i32>} : memref<1x16x16xi32, #tpu.memory_space<vmem>>, vector<1x16x16xi32>,
    return
  }
  func.func @transform_0(%arg0: i32) -> (i32, i32) {
    %c0_i32 = arith.constant 0 : i32
    %c0_i32_0 = arith.constant 0 : i32
    return %arg0, %c0_i32 : i32, i32
  }
  func.func @transform_1(%arg0: i32) -> (i32, i32, i32) {
    %c0_i32 = arith.constant 0 : i32
    %c0_i32_0 = arith.constant 0 : i32
    %c0_i32_1 = arith.constant 0 : i32
    return %arg0, %c0_i32, %c0_i32_0 : i32, i32, i32
  }
}

</mosaic_0001>

<llo_original>
// kernel: get_fast_seeder.1
$region0: #{get_fast_seeder.1}
  #allocation0 [shape = 'u32[]', space=smem, size = 0x4, offset = 0x4, fixed_abs, tag = 'smem constant byte address 0x4 - core index']
  #allocation1 [shape = 'u32[144,128]{1,0:T(1,128)}', space=vmem, size = 0x12000, scoped, tag = 'internal scratch']
  %s0 = inlined_call_operand.vmem [shape: s8[48,128], index: 0, kind: input, shape index: {}]
  %s1 = inlined_call_operand.hbm [shape: s32[2,16,16], index: 1, kind: output, shape index: {}]
  %s2 = sld [smem:[#allocation0]]
  $region37: #{get_fast_seeder.1} parent=0
    _
  %s4 = ssub.s32 1, %s2
  %s5 = scalar_select 0, %s4, %s2
  $region1: #{get_fast_seeder.1} parent=0
    #allocation2 [shape = 'u8[16384]{0}', space=vmem, size = 0x4000, scoped, tag = 'output window, operand 0']
    #allocation3 [shape = 's32[2]{0}', space=sflag, size = 0x8, scoped, tag = 'scoped memory for get_fast_seeder.1']
    %6 = vsyncpa [#allocation3], 0
    %s7 = scalar_lea.sflag [#allocation3], 1
    %8 = vsyncpa %s7, 0
    loop: start=0, step=1, limit=4
    $region2: #{get_fast_seeder.1} parent=1 // loop_pre_header
      _
    $region3: #{get_fast_seeder.1} parent=1 // loop_header
      %s10 = sphi 0, %s14
      %p11 = scmp.ge.s32.totalorder %s10, 4
      %s20 = sphi 0, %s22
      %s23 = sphi 0, %s20
      %s24 = sphi 0, %s23
      %s40 = sphi 0, %s24
      %s46 = sphi 0, %s48
      %s49 = sphi 0, %s46
      %s50 = sphi 0, %s49
      %s66 = sphi 0, %s50
    $region4: #{get_fast_seeder.1} parent=1 // loop_header_branch
      %13 = sbr.rel (%p11) target = $region8
    $region5: #{get_fast_seeder.1} parent=1 // loop_body
      %s15 = ssub.s32 %s10, 1
      %s16 = ssub.s32 %s10, 2
      %s17 = sadd.s32 %s10, 1
      %s18 = ssub.s32 %s10, %s17
      %p19 = scmp.eq.s32.totalorder %s18, 0
      %s21 = sadd.s32 %s20, 1
      %s22 = scalar_select %p19, %s20, %s21
      %p25 = pneg %p19
      %p26 = scmp.eq.s32.totalorder %s10, 1
      %p27 = por %p25, %p26
      %p28 = scmp.ne.s32.totalorder %s20, %s23
      %p29 = scmp.eq.s32.totalorder %s10, 0
      %p30 = por %p28, %p29
      %p31 = scmp.ne.s32.totalorder %s20, %s23
      %p32 = scmp.eq.s32.totalorder %s15, 1
      %p33 = por %p31, %p32
      %p34 = scmp.ne.s32.totalorder %s23, %s24
      %p35 = scmp.eq.s32.totalorder %s15, 0
      %p36 = por %p34, %p35
      %p37 = scmp.ne.s32.totalorder %s23, %s24
      %p38 = scmp.eq.s32.totalorder %s16, 1
      %p39 = por %p37, %p38
      %p41 = scmp.ne.s32.totalorder %s24, %s40
      %p42 = scmp.eq.s32.totalorder %s16, 0
      %p43 = por %p41, %p42
      %s44 = ssub.s32 %s10, %s17
      %p45 = scmp.eq.s32.totalorder %s44, 0
      %s47 = sadd.s32 %s46, 1
      %s48 = scalar_select %p45, %s46, %s47
      %p51 = pneg %p45
      %p52 = scmp.eq.s32.totalorder %s10, 1
      %p53 = por %p51, %p52
      %p54 = scmp.ne.s32.totalorder %s46, %s49
      %p55 = scmp.eq.s32.totalorder %s10, 0
      %p56 = por %p54, %p55
      %p57 = scmp.ne.s32.totalorder %s46, %s49
      %p58 = scmp.eq.s32.totalorder %s15, 1
      %p59 = por %p57, %p58
      %p60 = scmp.ne.s32.totalorder %s49, %s50
      %p61 = scmp.eq.s32.totalorder %s15, 0
      %p62 = por %p60, %p61
      %p63 = scmp.ne.s32.totalorder %s49, %s50
      %p64 = scmp.eq.s32.totalorder %s16, 1
      %p65 = por %p63, %p64
      %p67 = scmp.ne.s32.totalorder %s50, %s66
      %p68 = scmp.eq.s32.totalorder %s16, 0
      %p69 = por %p67, %p68
      %p70 = scmp.le.s32.totalorder 1, %s10
      %p71 = scmp.lt.s32.totalorder %s10, 3
      %p72 = pnand %p70, %p71
      %p73 = pneg %p72
      // Predicated region
      $region9: #{get_fast_seeder.1} parent=5 // pred_check
        _
      $region10: #{get_fast_seeder.1} parent=5 // pred_check_branch
        %75 = sbr.rel (%p72) target = $region12
      $region11: #{get_fast_seeder.1} parent=5 // pred_region
        %s76 = ssub.s32 %s10, 1
      $region12: #{get_fast_seeder.1} parent=5 // pred_fallthru
        _
      %p77 = scmp.lt.s32.totalorder %s10, 2
      // Predicated region
      $region13: #{get_fast_seeder.1} parent=5 // pred_check
        %p78 = pneg %p77
      $region14: #{get_fast_seeder.1} parent=5 // pred_check_branch
        %80 = sbr.rel (%p78) target = $region16
      $region15: #{get_fast_seeder.1} parent=5 // pred_region
        // Predicated region
        $region17: #{get_fast_seeder.1} parent=15 // pred_check
          %p81 = pneg %p30
        $region18: #{get_fast_seeder.1} parent=15 // pred_check_branch
          %83 = sbr.rel (%p81) target = $region20
        $region19: #{get_fast_seeder.1} parent=15 // pred_region
          %s84 = smul.u32 3, %s10
          %p85 = scmp.lt.s32.totalorder %s84, 5
          %s86 = scalar_select %p85, %s84, 5
          %s87 = smul.addr %s86, 2
          %s88 = scalar_lea.vmem %s0, %s87
          %s89 = smul.u32 3, %s10
        $region20: #{get_fast_seeder.1} parent=15 // pred_fallthru
          _
      $region16: #{get_fast_seeder.1} parent=5 // pred_fallthru
        _
      %p90 = scmp.le.s32.totalorder 1, %s10
      %p91 = scmp.lt.s32.totalorder %s10, 3
      %p92 = pnand %p90, %p91
      %p93 = pneg %p92
      // Predicated region
      $region21: #{get_fast_seeder.1} parent=5 // pred_check
        _
      $region22: #{get_fast_seeder.1} parent=5 // pred_check_branch
        %95 = sbr.rel (%p92) target = $region24
      $region23: #{get_fast_seeder.1} parent=5 // pred_region
        %s96 = ssub.s32 %s10, 1
        %s97 = smul.u32 3, %s15
        %p98 = scmp.lt.s32.totalorder %s97, 5
        %s99 = scalar_select %p98, %s97, 5
        %s100 = smul.addr %s99, 2
        %s101 = scalar_lea.vmem %s0, %s100
        %p102 = pneg %p36
        %p103 = pneg %p33
        %p104 = pneg %p62
        %p105 = pneg %p59
        %s106 = sand.u32 %s49, 1
        %s107 = scalar_lea.sflag [#allocation3], %s106
        %s108 = sand.u32 %s49, 1
        %s109 = smul.addr %s108, 16
        %s110 = scalar_lea.vmem [#allocation2], %s109
        %s111 = smul.u32 3, %s15
        %p112 = scmp.lt.s32.totalorder %s111, 5
        %s113 = scalar_select %p112, %s111, 5
        %s114 = smul.addr %s113, 2
        %s115 = scalar_lea.vmem %s0, %s114
        %s116 = smul.u32 3, %s15
        %v117 = vld [vmem:[%s115] sm:$0x3]
        %v118 = vld [vmem:[%s115 + $0x2] sm:$0x3]
        %v119 = vld [vmem:[%s115 + $0x4] sm:$0x3]
        %v120 = vunpack.c.0.s8 %v117
        %v121 = vunpack.c.0.s8 %v118
        %v122 = vunpack.c.0.s8 %v119
        %123 = vrot.lane.b32.xlu0 %v120, 1
        %v124 = vpop.permute.xlu0 %123
        %125 = vrot.lane.b32.xlu0 %v121, 1
        %v126 = vpop.permute.xlu0 %125
        %127 = vrot.lane.b32.xlu0 %v122, 1
        %v128 = vpop.permute.xlu0 %127
        %v129 = vor.u32 %v120, %v124
        %v130 = vor.u32 %v121, %v126
        %v131 = vor.u32 %v122, %v128
        %132 = vrot.lane.b32.xlu0 %v120, 127
        %v133 = vpop.permute.xlu0 %132
        %134 = vrot.lane.b32.xlu0 %v121, 127
        %v135 = vpop.permute.xlu0 %134
        %136 = vrot.lane.b32.xlu0 %v122, 127
        %v137 = vpop.permute.xlu0 %136
        %v138 = vor.u32 %v129, %v133
        %v139 = vor.u32 %v130, %v135
        %v140 = vor.u32 %v131, %v137
        %v141 = vrot.slane %v138, 7
        %v142 = vrot.slane %v139, 7
        %v143 = vrot.slane %v140, 7
        %v144 = vlaneseq
        %v145 = vshrl.u32 %v144, 7
        %vm146 = vcmp.lt.s32.totalorder %v145, 1
        %v147 = vsel %vm146, %v141, %v142
        %v148 = vsel %vm146, %v143, %v141
        %v149 = vor.u32 %v138, %v148
        %v150 = vor.u32 %v139, %v147
        %v151 = vrot.slane %v138, 1
        %v152 = vrot.slane %v139, 1
        %v153 = vrot.slane %v140, 1
        %vm154 = vcmp.lt.s32.totalorder %v145, 7
        %v155 = vsel %vm154, %v152, %v153
        %v156 = vsel %vm154, %v151, %v152
        %v157 = vor.u32 %v149, %v156
        %v158 = vor.u32 %v150, %v155
        %v159 = vand.u32 %v157, 1
        %v160 = vand.u32 %v158, 1
        %vm161 = vcmp.gt.s32.totalorder %v159, 0
        %vm162 = vcmp.gt.s32.totalorder %v160, 0
        %v163 = vand.u32 %v157, 2
        %v164 = vand.u32 %v158, 2
        %vm165 = vcmp.gt.s32.totalorder %v163, 0
        %vm166 = vcmp.gt.s32.totalorder %v164, 0
        %vm167 = vmxor %vm165, 1
        %vm168 = vmxor %vm166, 1
        %vm169 = vmand %vm161, %vm167
        %vm170 = vmand %vm162, %vm168
        %vm171 = vmxor %vm161, 1
        %vm172 = vmxor %vm162, 1
        %vm173 = vmand %vm165, %vm171
        %vm174 = vmand %vm166, %vm172
        %v175 = vsel %vm173, 0, 4294967041
        %v176 = vsel %vm174, 0, 4294967041
        %v177 = vsel %vm169, 1, %v175
        %v178 = vsel %vm170, 1, %v176
        %vm179 = vcmask 130048
        %180 = vst.msk [vmem:[%s110] sm:$0xff] %vm179, %v177
        %181 = vst.msk [vmem:[%s110 + $0x8] sm:$0xff] %vm179, %v178
        %s182 = sand.u32 %s49, 1
        %s183 = scalar_lea.sflag [#allocation3], %s182
        %s184 = sand.u32 %s49, 1
        %s185 = smul.addr %s184, 16
        %s186 = scalar_lea.vmem [#allocation2], %s185
        // Predicated region
        $region25: #{get_fast_seeder.1} parent=23 // pred_check
          %p187 = pneg %p59
        $region26: #{get_fast_seeder.1} parent=23 // pred_check_branch
          %189 = sbr.rel (%p187) target = $region28
        $region27: #{get_fast_seeder.1} parent=23 // pred_region
          %s191 = ssub.s32 256, 256
          %192 = vsyncadd %s183, %s191
          %s193 = smul.addr %s15, 2
          %s194 = smul.addr %s193, 128
          %s195 = scalar_lea.hbm %s1, %s194
          %s196 = sshll.u32 %s186, 4
          %s197 = int_to_ptr.vmem [resolvable:$true] %s196
          %202 = dma.vmem_to_hbm [thread:$0]  %s197, 256, %s195, %s183, 128, 128, 8
        $region28: #{get_fast_seeder.1} parent=23 // pred_fallthru
          _
      $region24: #{get_fast_seeder.1} parent=5 // pred_fallthru
        _
      %p203 = scmp.le.s32.totalorder 2, %s10
      // Predicated region
      $region29: #{get_fast_seeder.1} parent=5 // pred_check
        %p204 = pneg %p203
      $region30: #{get_fast_seeder.1} parent=5 // pred_check_branch
        %206 = sbr.rel (%p204) target = $region32
      $region31: #{get_fast_seeder.1} parent=5 // pred_region
        %s207 = ssub.s32 %s10, 2
        // Predicated region
        $region33: #{get_fast_seeder.1} parent=31 // pred_check
          %p208 = pneg %p65
        $region34: #{get_fast_seeder.1} parent=31 // pred_check_branch
          %210 = sbr.rel (%p208) target = $region36
        $region35: #{get_fast_seeder.1} parent=31 // pred_region
          %s211 = sand.u32 %s50, 1
          %s212 = scalar_lea.sflag [#allocation3], %s211
          %s213 = sand.u32 %s50, 1
          %s214 = smul.addr %s213, 16
          %s215 = scalar_lea.vmem [#allocation2], %s214
          %216 = dma.done %s212, 256
        $region36: #{get_fast_seeder.1} parent=31 // pred_fallthru
          _
      $region32: #{get_fast_seeder.1} parent=5 // pred_fallthru
        _
    $region6: #{get_fast_seeder.1} parent=1 // loop_footer
      %s14 = sadd.s32 1, %s10
    $region7: #{get_fast_seeder.1} parent=1 // loop_footer_branch
      %9 = sbr.rel target = $region3
    $region8: #{get_fast_seeder.1} parent=1 // loop_exit
      _
    %217 = vsyncpa [#allocation3], 1
    %s218 = scalar_lea.sflag [#allocation3], 1
    %219 = vsyncpa %s218, 1

</llo_original>
